<compile_context>
chip_gen: v7x
topology: tpu7x:2x2x1
jax: 0.10.0
libtpu: 0.0.40
codegen_flags: <defaults>
</compile_context>

<pallas_src>
import functools
import math

import jax
import jax.numpy as jnp
from jax.experimental import pallas as pl
from jax.experimental.pallas import tpu as pltpu

LN_EPS = 1e-5                      # torch.nn.LayerNorm default
_INV_SQRT2 = 1.0 / math.sqrt(2.0)  # exact-GELU constant


def _round_up(a: int, b: int) -> int:
    return (a + b - 1) // b * b


def ebdecoder_kernel(x_ref, gamma_ref, beta_ref, w_ref, b_ref, o_ref):
    # x_ref:     (tm, dmodel)  input rows tile
    # gamma_ref: (1, dmodel)   f32 LN scale (resident, constant index_map)
    # beta_ref:  (1, dmodel)   f32 LN shift
    # w_ref:     (dmodel, tn)  weight tile, pre-transposed, original dtype
    # b_ref:     (1, tn)       f32 bias tile
    # o_ref:     (tm, tn)      output tile
    x = x_ref[...].astype(jnp.float32)
    inv_d = jnp.float32(1.0 / x.shape[-1])

    # ---- LayerNorm (single-pass stats, f32, biased variance like torch) ----
    row_sum = jnp.sum(x, axis=-1, keepdims=True)
    row_sumsq = jnp.sum(x * x, axis=-1, keepdims=True)
    mean = row_sum * inv_d
    var = jnp.maximum(row_sumsq * inv_d - mean * mean, 0.0)
    xn = (x - mean) * jax.lax.rsqrt(var + LN_EPS)
    xn = xn * gamma_ref[...] + beta_ref[...]          # gamma/beta already f32

    # ---- Linear: feed MXU in the weight's dtype, accumulate in f32 ----
    y = jnp.dot(xn.astype(w_ref.dtype), w_ref[...],
                preferred_element_type=jnp.float32)
    y = y + b_ref[...]

    # ---- Exact GELU (torch.nn.GELU(), approximate='none') ----
    out = 0.5 * y * (1.0 + jax.lax.erf(y * _INV_SQRT2))

    o_ref[...] = out.astype(o_ref.dtype)


def prepare_decoder_params(weight, bias, gamma, beta):
    """One-time parameter prep (hoisted out of the per-call path).

    weight: (targetsdim, dmodel) PyTorch layout -> returned as (dmodel, targetsdim).
    gamma/beta/bias are cast to f32 once (they are tiny).
    """
    return (gamma.astype(jnp.float32),
            beta.astype(jnp.float32),
            jnp.asarray(weight).T,          # (dmodel, targetsdim)
            bias.astype(jnp.float32))


@functools.partial(jax.jit, static_argnames=("tile_m", "tile_n"))
def ebdecoder_forward(inputs, gamma_f32, beta_f32, weight_t, bias_f32,
                      *, tile_m: int = 256, tile_n: int = 512):
    """inputs: (..., dmodel); weight_t: (dmodel, targetsdim) pre-transposed."""
    dmodel = inputs.shape[-1]
    targetsdim = weight_t.shape[1]
    lead_shape = inputs.shape[:-1]

    x2d = inputs.reshape(-1, dmodel)
    M = x2d.shape[0]

    # Tile sizes: rows in multiples of 8, output features in multiples of 128
    # (lane-dense output); clamp so tiny demos don't over-pad.
    tm = min(tile_m, _round_up(M, 8))
    tn = min(tile_n, _round_up(targetsdim, 128))

    Mp = _round_up(M, tm)
    Np = _round_up(targetsdim, tn)

    if Mp != M:
        x2d = jnp.pad(x2d, ((0, Mp - M), (0, 0)))
    w = weight_t
    b2 = bias_f32.reshape(1, targetsdim)
    if Np != targetsdim:
        w = jnp.pad(w, ((0, 0), (0, Np - targetsdim)))
        b2 = jnp.pad(b2, ((0, 0), (0, Np - targetsdim)))
    gamma2 = gamma_f32.reshape(1, dmodel)
    beta2 = beta_f32.reshape(1, dmodel)

    grid = (Mp // tm, Np // tn)

    # --- VMEM budget (double-buffered blocks) + explicit limit ---------------
    x_bytes = tm * dmodel * x2d.dtype.itemsize
    w_bytes = dmodel * tn * w.dtype.itemsize
    o_bytes = tm * tn * jnp.dtype(inputs.dtype).itemsize
    small_bytes = (2 * dmodel + tn) * 4
    vmem_budget = 2 * (x_bytes + w_bytes + o_bytes + small_bytes) + (4 << 20)
    vmem_limit = int(min(max(vmem_budget, 8 << 20), 64 << 20))

    # --- Cost estimate (helps XLA schedule around the kernel) ----------------
    cost = pl.CostEstimate(
        flops=2 * Mp * dmodel * Np + 10 * Mp * dmodel + 8 * Mp * Np,
        transcendentals=Mp * Np + Mp,
        bytes_accessed=(Mp * dmodel * x2d.dtype.itemsize
                        + dmodel * Np * w.dtype.itemsize
                        + Mp * Np * jnp.dtype(inputs.dtype).itemsize
                        + (2 * dmodel + Np) * 4),
    )

    out = pl.pallas_call(
        ebdecoder_kernel,
        out_shape=jax.ShapeDtypeStruct((Mp, Np), inputs.dtype),
        grid_spec=pltpu.PrefetchScalarGridSpec(
            num_scalar_prefetch=0,
            grid=grid,
            in_specs=[
                pl.BlockSpec((tm, dmodel), lambda i, j: (i, 0)),   # x rows
                pl.BlockSpec((1, dmodel), lambda i, j: (0, 0)),    # gamma (resident)
                pl.BlockSpec((1, dmodel), lambda i, j: (0, 0)),    # beta  (resident)
                pl.BlockSpec((dmodel, tn), lambda i, j: (0, j)),   # W^T N-tile
                pl.BlockSpec((1, tn), lambda i, j: (0, j)),        # bias N-tile
            ],
            out_specs=pl.BlockSpec((tm, tn), lambda i, j: (i, j)),
        ),
        compiler_params=pltpu.CompilerParams(
            dimension_semantics=("parallel", "parallel"),
            vmem_limit_bytes=vmem_limit,
        ),
        cost_estimate=cost,
    )(x2d, gamma2, beta2, w, b2)

    out = out[:M, :targetsdim]
    return out.reshape(*lead_shape, targetsdim)


def _reference(inputs, gamma, beta, weight, bias):
    x = inputs.astype(jnp.float32)
    mean = jnp.mean(x, axis=-1, keepdims=True)
    var = jnp.mean((x - mean) ** 2, axis=-1, keepdims=True)
    xn = (x - mean) / jnp.sqrt(var + LN_EPS) * gamma + beta
    y = xn @ weight.T.astype(jnp.float32) + bias
    return 0.5 * y * (1.0 + jax.lax.erf(y * _INV_SQRT2))


if __name__ == "__main__":
    # Small shapes consistent with the module: (batch, seq, dmodel) -> (batch, seq, targetsdim)
    batch, seq, dmodel, targetsdim = 2, 8, 32, 16

    key = jax.random.PRNGKey(0)
    k_x, k_w, k_b, k_g, k_be, k_x2 = jax.random.split(key, 6)

    inputs = jax.random.normal(k_x, (batch, seq, dmodel), dtype=jnp.float32)

    # Deterministic synthetic parameters mirroring __init__ shapes.
    gamma = 1.0 + 0.05 * jax.random.normal(k_g, (dmodel,), dtype=jnp.float32)
    beta = 0.05 * jax.random.normal(k_be, (dmodel,), dtype=jnp.float32)
    weight = jax.random.normal(k_w, (targetsdim, dmodel), dtype=jnp.float32) / jnp.sqrt(dmodel)
    bias = 0.1 * jax.random.normal(k_b, (targetsdim,), dtype=jnp.float32)

    # One-time param prep (weight transpose hoisted out of the forward path).
    gamma_p, beta_p, weight_t, bias_p = prepare_decoder_params(weight, bias, gamma, beta)

    # Main check.
    out = ebdecoder_forward(inputs, gamma_p, beta_p, weight_t, bias_p)
    out = jax.block_until_ready(out)
    ref = _reference(inputs, gamma, beta, weight, bias)
    assert out.shape == (batch, seq, targetsdim)
    assert jnp.allclose(out, ref, atol=5e-5, rtol=5e-5), "mismatch vs reference"

    # Second check exercising the row/feature padding path (M not a tile multiple).
    inputs2 = jax.random.normal(k_x2, (3, 5, dmodel), dtype=jnp.float32)
    out2 = jax.block_until_ready(
        ebdecoder_forward(inputs2, gamma_p, beta_p, weight_t, bias_p))
    ref2 = _reference(inputs2, gamma, beta, weight, bias)
    assert out2.shape == (3, 5, targetsdim)
    assert jnp.allclose(out2, ref2, atol=5e-5, rtol=5e-5), "mismatch vs reference (padded case)"

    print("KERNEL_OK")
</pallas_src>

<mosaic_0001>
module attributes {stable_mosaic.version = 11 : i64} {
  func.func @ebdecoder_kernel(%arg0: i32, %arg1: i32, %arg2: memref<16x32xf32, #tpu.memory_space<vmem>>, %arg3: memref<1x32xf32, #tpu.memory_space<vmem>>, %arg4: memref<1x32xf32, #tpu.memory_space<vmem>>, %arg5: memref<32x128xf32, #tpu.memory_space<vmem>>, %arg6: memref<1x128xf32, #tpu.memory_space<vmem>>, %arg7: memref<16x128xf32, #tpu.memory_space<vmem>>) attributes {dimension_semantics = [#tpu.dimension_semantics<parallel>, #tpu.dimension_semantics<parallel>], iteration_bounds = array<i64: 1, 1>, scalar_prefetch = 0 : i64, scratch_operands = 0 : i64, tpu.core_type = #tpu.core_type<tc>, window_params = [{transform_indices = @transform_0, window_bounds = array<i64: 16, 32>}, {pipeline_mode = #tpu.pipeline_mode<synchronous>, transform_indices = @transform_1, window_bounds = array<i64: 1, 32>}, {pipeline_mode = #tpu.pipeline_mode<synchronous>, transform_indices = @transform_2, window_bounds = array<i64: 1, 32>}, {transform_indices = @transform_3, window_bounds = array<i64: 32, 128>}, {transform_indices = @transform_4, window_bounds = array<i64: 1, 128>}, {transform_indices = @transform_5, window_bounds = array<i64: 16, 128>}]} {
    %c0 = arith.constant 0 : index
    %c0_0 = arith.constant 0 : index
    %0 = vector.load %arg2[%c0, %c0_0] : memref<16x32xf32, #tpu.memory_space<vmem>>, vector<16x32xf32>
    %cst = arith.constant dense<0.000000e+00> : vector<16xf32>
    %1 = vector.multi_reduction <add>, %0, %cst [1] : vector<16x32xf32> to vector<16xf32>
    %2 = vector.shape_cast %1 : vector<16xf32> to vector<16x1xf32>
    %3 = arith.mulf %0, %0 : vector<16x32xf32>
    %cst_1 = arith.constant dense<0.000000e+00> : vector<16xf32>
    %4 = vector.multi_reduction <add>, %3, %cst_1 [1] : vector<16x32xf32> to vector<16xf32>
    %5 = vector.shape_cast %4 : vector<16xf32> to vector<16x1xf32>
    %cst_2 = arith.constant 3.125000e-02 : f32
    %6 = vector.broadcast %cst_2 : f32 to vector<16x1xf32>
    %7 = arith.mulf %2, %6 : vector<16x1xf32>
    %cst_3 = arith.constant 3.125000e-02 : f32
    %8 = vector.broadcast %cst_3 : f32 to vector<16x1xf32>
    %9 = arith.mulf %5, %8 : vector<16x1xf32>
    %10 = arith.mulf %7, %7 : vector<16x1xf32>
    %11 = arith.subf %9, %10 : vector<16x1xf32>
    %cst_4 = arith.constant 0.000000e+00 : f32
    %12 = vector.broadcast %cst_4 : f32 to vector<16x1xf32>
    %13 = arith.maximumf %11, %12 : vector<16x1xf32>
    %14 = vector.broadcast %7 : vector<16x1xf32> to vector<16x32xf32>
    %15 = arith.subf %0, %14 : vector<16x32xf32>
    %cst_5 = arith.constant 9.99999974E-6 : f32
    %16 = vector.broadcast %cst_5 : f32 to vector<16x1xf32>
    %17 = arith.addf %13, %16 : vector<16x1xf32>
    %18 = math.rsqrt %17 : vector<16x1xf32>
    %19 = vector.broadcast %18 : vector<16x1xf32> to vector<16x32xf32>
    %20 = arith.mulf %15, %19 : vector<16x32xf32>
    %c0_6 = arith.constant 0 : index
    %c0_7 = arith.constant 0 : index
    %21 = vector.load %arg3[%c0_6, %c0_7] : memref<1x32xf32, #tpu.memory_space<vmem>>, vector<1x32xf32>
    %22 = vector.broadcast %21 : vector<1x32xf32> to vector<16x32xf32>
    %23 = arith.mulf %20, %22 : vector<16x32xf32>
    %c0_8 = arith.constant 0 : index
    %c0_9 = arith.constant 0 : index
    %24 = vector.load %arg4[%c0_8, %c0_9] : memref<1x32xf32, #tpu.memory_space<vmem>>, vector<1x32xf32>
    %25 = vector.broadcast %24 : vector<1x32xf32> to vector<16x32xf32>
    %26 = arith.addf %23, %25 : vector<16x32xf32>
    %c0_10 = arith.constant 0 : index
    %c0_11 = arith.constant 0 : index
    %27 = vector.load %arg5[%c0_10, %c0_11] : memref<32x128xf32, #tpu.memory_space<vmem>>, vector<32x128xf32>
    %cst_12 = arith.constant dense<0.000000e+00> : vector<16x128xf32>
    %28 = tpu.matmul %26, %27, %cst_12 {dimension_numbers = #tpu.dot_dimension_numbers<[1], [0], [0], [1], [0, 0, 1, 1], [], []>} : vector<16x32xf32>, vector<32x128xf32>, vector<16x128xf32> -> vector<16x128xf32>
    %c0_13 = arith.constant 0 : index
    %c0_14 = arith.constant 0 : index
    %29 = vector.load %arg6[%c0_13, %c0_14] : memref<1x128xf32, #tpu.memory_space<vmem>>, vector<1x128xf32>
    %30 = vector.broadcast %29 : vector<1x128xf32> to vector<16x128xf32>
    %31 = arith.addf %28, %30 : vector<16x128xf32>
    %cst_15 = arith.constant 5.000000e-01 : f32
    %32 = vector.broadcast %cst_15 : f32 to vector<16x128xf32>
    %33 = arith.mulf %32, %31 : vector<16x128xf32>
    %cst_16 = arith.constant 0.707106769 : f32
    %34 = vector.broadcast %cst_16 : f32 to vector<16x128xf32>
    %35 = arith.mulf %31, %34 : vector<16x128xf32>
    %36 = math.erf %35 : vector<16x128xf32>
    %cst_17 = arith.constant 1.000000e+00 : f32
    %37 = vector.broadcast %cst_17 : f32 to vector<16x128xf32>
    %38 = arith.addf %37, %36 : vector<16x128xf32>
    %39 = arith.mulf %33, %38 : vector<16x128xf32>
    %c0_18 = arith.constant 0 : index
    %c0_19 = arith.constant 0 : index
    %40 = vector.load %arg7[%c0_18, %c0_19] : memref<16x128xf32, #tpu.memory_space<vmem>>, vector<16x128xf32>
    tpu.vector_store %arg7[%c0_18, %c0_19], %39 {strides = array<i32>} : memref<16x128xf32, #tpu.memory_space<vmem>>, vector<16x128xf32>,
    return
  }
  func.func @transform_0(%arg0: i32, %arg1: i32) -> (i32, i32) {
    %c0_i32 = arith.constant 0 : i32
    %c0_i32_0 = arith.constant 0 : i32
    return %arg0, %c0_i32 : i32, i32
  }
  func.func @transform_1(%arg0: i32, %arg1: i32) -> (i32, i32) {
    %c0_i32 = arith.constant 0 : i32
    %c0_i32_0 = arith.constant 0 : i32
    %c0_i32_1 = arith.constant 0 : i32
    return %c0_i32, %c0_i32_0 : i32, i32
  }
  func.func @transform_2(%arg0: i32, %arg1: i32) -> (i32, i32) {
    %c0_i32 = arith.constant 0 : i32
    %c0_i32_0 = arith.constant 0 : i32
    %c0_i32_1 = arith.constant 0 : i32
    return %c0_i32, %c0_i32_0 : i32, i32
  }
  func.func @transform_3(%arg0: i32, %arg1: i32) -> (i32, i32) {
    %c0_i32 = arith.constant 0 : i32
    %c0_i32_0 = arith.constant 0 : i32
    return %c0_i32, %arg1 : i32, i32
  }
  func.func @transform_4(%arg0: i32, %arg1: i32) -> (i32, i32) {
    %c0_i32 = arith.constant 0 : i32
    %c0_i32_0 = arith.constant 0 : i32
    return %c0_i32, %arg1 : i32, i32
  }
  func.func @transform_5(%arg0: i32, %arg1: i32) -> (i32, i32) {
    %c0_i32 = arith.constant 0 : i32
    return %arg0, %arg1 : i32, i32
  }
}

</mosaic_0001>

<llo_original>
// kernel: ebdecoder_forward.1
$region0: #{ebdecoder_forward.1}
  #allocation0 [shape = 'u32[]', space=smem, size = 0x4, offset = 0x4, fixed_abs, tag = 'smem constant byte address 0x4 - core index']
  #allocation1 [shape = 'u32[144,128]{1,0:T(1,128)}', space=vmem, size = 0x12000, scoped, tag = 'internal scratch']
  %s0 = inlined_call_operand.vmem [shape: f32[16,32], index: 0, kind: input, shape index: {}]
  %s1 = inlined_call_operand.vmem [shape: f32[1,32], index: 1, kind: input, shape index: {}]
  %s2 = inlined_call_operand.vmem [shape: f32[1,32], index: 2, kind: input, shape index: {}]
  %s3 = inlined_call_operand.vmem [shape: f32[32,128], index: 3, kind: input, shape index: {}]
  %s4 = inlined_call_operand.vmem [shape: f32[1,128], index: 4, kind: input, shape index: {}]
  %s5 = inlined_call_operand.vmem [shape: f32[16,128], index: 5, kind: output, shape index: {}]
  %s6 = sld [smem:[#allocation0]]
  $region30: #{ebdecoder_forward.1} parent=0
    _
  %s8 = ssub.s32 1, %s6
  %s9 = scalar_select 0, %s8, %s6
  // Predicated region
  $region2: #{ebdecoder_forward.1} parent=0 // pred_check
    _
  $region3: #{ebdecoder_forward.1} parent=0 // pred_check_branch
    %11 = sbr.rel (0) target = $region5
  $region4: #{ebdecoder_forward.1} parent=0 // pred_region
    _
  $region5: #{ebdecoder_forward.1} parent=0 // pred_fallthru
    _
  // Predicated region
  $region6: #{ebdecoder_forward.1} parent=0 // pred_check
    _
  $region7: #{ebdecoder_forward.1} parent=0 // pred_check_branch
    %13 = sbr.rel (0) target = $region9
  $region8: #{ebdecoder_forward.1} parent=0 // pred_region
    _
  $region9: #{ebdecoder_forward.1} parent=0 // pred_fallthru
    _
  // Predicated region
  $region10: #{ebdecoder_forward.1} parent=0 // pred_check
    _
  $region11: #{ebdecoder_forward.1} parent=0 // pred_check_branch
    %15 = sbr.rel (0) target = $region13
  $region12: #{ebdecoder_forward.1} parent=0 // pred_region
    _
  $region13: #{ebdecoder_forward.1} parent=0 // pred_fallthru
    _
  // Predicated region
  $region14: #{ebdecoder_forward.1} parent=0 // pred_check
    _
  $region15: #{ebdecoder_forward.1} parent=0 // pred_check_branch
    %17 = sbr.rel (0) target = $region17
  $region16: #{ebdecoder_forward.1} parent=0 // pred_region
    _
  $region17: #{ebdecoder_forward.1} parent=0 // pred_fallthru
    _
  // Predicated region
  $region18: #{ebdecoder_forward.1} parent=0 // pred_check
    _
  $region19: #{ebdecoder_forward.1} parent=0 // pred_check_branch
    %19 = sbr.rel (0) target = $region21
  $region20: #{ebdecoder_forward.1} parent=0 // pred_region
    _
  $region21: #{ebdecoder_forward.1} parent=0 // pred_fallthru
    _
  %v20 = vld [vmem:[%s0] sm:$0xff]
  %v21 = vld [vmem:[%s0 + $0x8] sm:$0xff]
  %vm22 = vcmask 261120
  %v23 = vsel %vm22, %v20, 0.0
  %24 = vadd.xlane.f32.xlu0 %v23
  %v25 = vpop.xlane.xlu0 %24
  %v26 = vsel %vm22, %v21, 0.0
  %27 = vadd.xlane.f32.xlu0 %v26
  %v28 = vpop.xlane.xlu0 %27
  %v29 = vmul.f32 %v20, %v20
  %v30 = vmul.f32 %v21, %v21
  %v31 = vsel %vm22, %v29, 0.0
  %32 = vadd.xlane.f32.xlu0 %v31
  %v33 = vpop.xlane.xlu0 %32
  %v34 = vsel %vm22, %v30, 0.0
  %35 = vadd.xlane.f32.xlu0 %v34
  %v36 = vpop.xlane.xlu0 %35
  %v37 = vmul.f32 %v25, 0.03125
  %v38 = vmul.f32 %v28, 0.03125
  %v39 = vmul.f32 %v33, 0.03125
  %v40 = vmul.f32 %v36, 0.03125
  %v41 = vmul.f32 %v37, %v37
  %v42 = vmul.f32 %v38, %v38
  %v43 = vsub.f32 %v39, %v41
  %v44 = vsub.f32 %v40, %v42
  %v45 = vmax.f32 %v43, 0.0
  %v46 = vmax.f32 %v44, 0.0
  %v47 = vsub.f32 %v20, %v37
  %v48 = vsub.f32 %v21, %v38
  %v49 = vadd.f32 %v45, 1e-05
  %v50 = vadd.f32 %v46, 1e-05
  %v51 = vrsqrt.pop %v49
  %v52 = vrsqrt.pop %v50
  %v53 = vmul.f32 %v47, %v51
  %v54 = vmul.f32 %v48, %v52
  %v55 = vld [vmem:[%s1] sm:$0x1]
  %v57 = vlaneseq
  %v58 = vshrl.u32 %v57, 7
  %v59 = vsub.s32 0, %v58
  %v60 = vrot.slane %v55, %v59
  %v62 = vmul.f32 %v53, %v60
  %v63 = vmul.f32 %v54, %v60
  %v64 = vld [vmem:[%s2] sm:$0x1]
  %v66 = vlaneseq
  %v67 = vshrl.u32 %v66, 7
  %v68 = vsub.s32 0, %v67
  %v69 = vrot.slane %v64, %v68
  %v71 = vadd.f32 %v62, %v69
  %v72 = vadd.f32 %v63, %v69
  %v73 = vld [vmem:[%s3] sm:$0xff]
  %v74 = vld [vmem:[%s3 + $0x8] sm:$0xff]
  %v75 = vld [vmem:[%s3 + $0x10] sm:$0xff]
  %v76 = vld [vmem:[%s3 + $0x18] sm:$0xff]
  %v77 = vld [vmem:[%s4] sm:$0x1]
  %v79 = vlaneseq
  %v80 = vshrl.u32 %v79, 7
  %v81 = vsub.s32 0, %v80
  %v82 = vrot.slane %v77, %v81
  %v85 = vsel %vm22, %v71, 0
  %v88 = vsel %vm22, %v72, 0
  %90 = vmatprep.subr.mxu0 0.0
  %91 = vmatpush1.msra.mxu0 %v73
  %92 = vmatprep.subr.mxu0 0.0
  %93 = vmatpush1.msra.mxu0 %v74
  %94 = vmatprep.subr.mxu0 0.0
  %95 = vmatpush1.msra.mxu0 %v75
  %96 = vmatprep.subr.mxu0 0.0
  %97 = vmatpush1.msra.mxu0 %v76
  %98 = vmatprep.subr.mxu0 0.0
  %99 = vmatpush1.msra.mxu0 0.0
  %100 = vmatprep.subr.mxu0 0.0
  %101 = vmatpush1.msra.mxu0 0.0
  %102 = vmatprep.subr.mxu0 0.0
  %103 = vmatpush1.msra.mxu0 0.0
  %104 = vmatprep.subr.mxu0 0.0
  %105 = vmatpush1.msra.mxu0 0.0
  %106 = vmatprep.subr.mxu0 0.0
  %107 = vmatpush1.msra.mxu0 0.0
  %108 = vmatprep.subr.mxu0 0.0
  %109 = vmatpush1.msra.mxu0 0.0
  %110 = vmatprep.subr.mxu0 0.0
  %111 = vmatpush1.msra.mxu0 0.0
  %112 = vmatprep.subr.mxu0 0.0
  %113 = vmatpush1.msra.mxu0 0.0
  %114 = vmatprep.subr.mxu0 0.0
  %115 = vmatpush1.msra.mxu0 0.0
  %116 = vmatprep.subr.mxu0 0.0
  %117 = vmatpush1.msra.mxu0 0.0
  %118 = vmatprep.subr.mxu0 0.0
  %119 = vmatpush1.msra.mxu0 0.0
  %120 = vmatprep.subr.mxu0 0.0
  %121 = vmatpush1.msra.mxu0 0.0
  %122 = vmatprep.subr.mxu0 0.0
  %123 = vmatpush1.msra.mxu0 0.0
  %124 = vmatprep.subr.mxu0 0.0
  %125 = vmatpush1.msra.mxu0 0.0
  %126 = vmatprep.subr.mxu0 0.0
  %127 = vmatpush1.msra.mxu0 0.0
  %128 = vmatprep.subr.mxu0 0.0
  %129 = vmatpush1.msra.mxu0 0.0
  %130 = vmatprep.subr.mxu0 0.0
  %131 = vmatpush1.msra.mxu0 0.0
  %132 = vmatprep.subr.mxu0 0.0
  %133 = vmatpush1.msra.mxu0 0.0
  %134 = vmatprep.subr.mxu0 0.0
  %135 = vmatpush1.msra.mxu0 0.0
  %136 = vmatprep.subr.mxu0 0.0
  %137 = vmatpush1.msra.mxu0 0.0
  %138 = vmatprep.subr.mxu0 0.0
  %139 = vmatpush1.msra.mxu0 0.0
  %140 = vmatprep.subr.mxu0 0.0
  %141 = vmatpush1.msra.mxu0 0.0
  %142 = vmatprep.subr.mxu0 0.0
  %143 = vmatpush1.msra.mxu0 0.0
  %144 = vmatprep.subr.mxu0 0.0
  %145 = vmatpush1.msra.mxu0 0.0
  %146 = vmatprep.subr.mxu0 0.0
  %147 = vmatpush1.msra.mxu0 0.0
  %148 = vmatprep.subr.mxu0 0.0
  %149 = vmatpush1.msra.mxu0 0.0
  %150 = vmatprep.subr.mxu0 0.0
  %151 = vmatpush1.msra.mxu0 0.0
  %152 = vmatprep.subr.mxu0 0.0
  %153 = vmatpush1.msra.mxu0 0.0
  %154 = vmatprep.mubr.f32.mxu0 0.0
  %155 = vmatmul.mubr.f32.gmra.mrb[0].mxu0 %v85
  %v156 = vpop.f32.mrb[0].mxu0
  %v157 = vadd.f32 %v82, %v156
  %v158 = vpop.f32.mrb[0].mxu0
  %159 = vmatprep.mubr.f32.mxu0 0.0
  %160 = vmatmul.mubr.f32.gmra.mrb[0].mxu0 %v88
  %v161 = vpop.f32.mrb[0].mxu0
  %v162 = vadd.f32 %v82, %v161
  %v163 = vpop.f32.mrb[0].mxu0
  %164 = vdwg.mxu0
  %v165 = vmul.f32 %v157, 0.5
  %v166 = vmul.f32 %v162, 0.5
  %v167 = vmul.f32 %v157, 0.70710677
  %v168 = vmul.f32 %v162, 0.70710677
  %v169 = verf.f32.pop %v167
  %v170 = verf.f32.pop %v168
  %v171 = vadd.f32 %v169, 1.0
  %v172 = vadd.f32 %v170, 1.0
  %v173 = vmul.f32 %v165, %v171
  %v174 = vmul.f32 %v166, %v172
  %175 = vst [vmem:[%s5] sm:$0xff] %v173
  %176 = vst [vmem:[%s5 + $0x8] sm:$0xff] %v174
  // Predicated region
  $region22: #{ebdecoder_forward.1} parent=0 // pred_check
    _
  $region23: #{ebdecoder_forward.1} parent=0 // pred_check_branch
    %178 = sbr.rel (0) target = $region25
  $region24: #{ebdecoder_forward.1} parent=0 // pred_region
    _
  $region25: #{ebdecoder_forward.1} parent=0 // pred_fallthru
    _
  // Predicated region
  $region26: #{ebdecoder_forward.1} parent=0 // pred_check
    _
  $region27: #{ebdecoder_forward.1} parent=0 // pred_check_branch
    %180 = sbr.rel (0) target = $region29
  $region28: #{ebdecoder_forward.1} parent=0 // pred_region
    _
  $region29: #{ebdecoder_forward.1} parent=0 // pred_fallthru
    _

</llo_original>
